<compile_context>
chip_gen: v7x
topology: tpu7x:2x2x1
jax: 0.10.0
libtpu: 0.0.40
codegen_flags: <defaults>
</compile_context>

<pallas_src>
import functools

import jax
import jax.numpy as jnp
from jax.experimental import pallas as pl
from jax.experimental.pallas import tpu as pltpu

_TM = 256  # row tile (tokens) for the conv/positional-embedding kernel


def _silu(x):
    return x * (1.0 / (1.0 + jnp.exp(-x)))


def _round_up(x, m):
    return (x + m - 1) // m * m


# ---------------------------------------------------------------------------
# Kernel 1: Conv(1x1) + BN + SiLU fused with the positional Linear + residual
# ---------------------------------------------------------------------------
def _conv_embed_kernel(x_ref, wc_ref, s_ref, b_ref, wl_ref, bl_ref, o_ref):
    """o = h + h @ wl + bl,  where h = SiLU(BN(x @ wc))."""
    h = jnp.dot(x_ref[...], wc_ref[...], preferred_element_type=jnp.float32)
    h = _silu(h * s_ref[...] + b_ref[...])
    o = h + jnp.dot(h, wl_ref[...], preferred_element_type=jnp.float32) + bl_ref[...]
    o_ref[...] = o.astype(o_ref.dtype)


def _embed_kernel(x_ref, wl_ref, bl_ref, o_ref):
    """c1 == c2 path (no Conv): o = x + x @ wl + bl."""
    x = x_ref[...]
    o = x + jnp.dot(x, wl_ref[...], preferred_element_type=jnp.float32) + bl_ref[...]
    o_ref[...] = o.astype(o_ref.dtype)


def _row_tile(m):
    tm = min(_TM, _round_up(m, 8))
    return tm, _round_up(m, tm)


def conv_embed(x, wc, bn_s, bn_b, wl, bl):
    m, c1 = x.shape
    c2 = wc.shape[1]
    tm, m_pad = _row_tile(m)
    if m_pad != m:
        x = jnp.pad(x, ((0, m_pad - m), (0, 0)))
    out = pl.pallas_call(
        _conv_embed_kernel,
        out_shape=jax.ShapeDtypeStruct((m_pad, c2), x.dtype),
        grid=(m_pad // tm,),
        in_specs=[pl.BlockSpec((tm, c1), lambda i: (i, 0)),
                  pl.BlockSpec((c1, c2), lambda i: (0, 0)),
                  pl.BlockSpec((1, c2), lambda i: (0, 0)),
                  pl.BlockSpec((1, c2), lambda i: (0, 0)),
                  pl.BlockSpec((c2, c2), lambda i: (0, 0)),
                  pl.BlockSpec((1, c2), lambda i: (0, 0))],
        out_specs=pl.BlockSpec((tm, c2), lambda i: (i, 0)),
        compiler_params=pltpu.CompilerParams(dimension_semantics=("parallel",)),
    )(x, wc, bn_s, bn_b, wl, bl)
    return out[:m]


def embed(x, wl, bl):
    m, c = x.shape
    tm, m_pad = _row_tile(m)
    if m_pad != m:
        x = jnp.pad(x, ((0, m_pad - m), (0, 0)))
    out = pl.pallas_call(
        _embed_kernel,
        out_shape=jax.ShapeDtypeStruct((m_pad, c), x.dtype),
        grid=(m_pad // tm,),
        in_specs=[pl.BlockSpec((tm, c), lambda i: (i, 0)),
                  pl.BlockSpec((c, c), lambda i: (0, 0)),
                  pl.BlockSpec((1, c), lambda i: (0, 0))],
        out_specs=pl.BlockSpec((tm, c), lambda i: (i, 0)),
        compiler_params=pltpu.CompilerParams(dimension_semantics=("parallel",)),
    )(x, wl, bl)
    return out[:m]


# ---------------------------------------------------------------------------
# Kernel 2: whole TransformerLayer stack, one pallas_call, grid=(batch, layers)
# ---------------------------------------------------------------------------
def _tr_stack_kernel(p_ref, wq_ref, wk_ref, wv_ref, bq_ref, bk_ref, bv_ref,
                     wo_ref, bo_ref, w1_ref, w2_ref, o_ref, acc_ref, *, num_heads):
    layer = pl.program_id(1)

    @pl.when(layer == 0)
    def _():
        acc_ref[...] = p_ref[0]          # load this batch element's tokens once

    x = acc_ref[...]                     # (S, C); stays in VMEM across the layer axis
    seq, c = x.shape
    dh = c // num_heads
    scale = 1.0 / float(dh) ** 0.5

    # Folded (outer Linear @ MHA in-proj) projections; torch scales q (incl. bias).
    q = (jnp.dot(x, wq_ref[0], preferred_element_type=jnp.float32) + bq_ref[0]) * scale
    k = jnp.dot(x, wk_ref[0], preferred_element_type=jnp.float32) + bk_ref[0]
    v = jnp.dot(x, wv_ref[0], preferred_element_type=jnp.float32) + bv_ref[0]

    # Multi-head attention; head-concat + out-proj expressed as a per-head
    # block matmul accumulated straight into the residual (no concat buffer).
    w_o = wo_ref[0]
    y = x + bo_ref[0]
    for h in range(num_heads):
        lo = h * dh
        logits = jax.lax.dot_general(q[:, lo:lo + dh], k[:, lo:lo + dh],
                                     (((1,), (1,)), ((), ())),
                                     preferred_element_type=jnp.float32)   # (S, S)
        logits = logits - jnp.max(logits, axis=-1, keepdims=True)
        e = jnp.exp(logits)
        attn = e / jnp.sum(e, axis=-1, keepdims=True)
        head = jnp.dot(attn, v[:, lo:lo + dh], preferred_element_type=jnp.float32)
        y = y + jnp.dot(head, w_o[lo:lo + dh, :], preferred_element_type=jnp.float32)

    # Bias-free two-layer MLP + residual.
    z = jnp.dot(jnp.dot(y, w1_ref[0], preferred_element_type=jnp.float32),
                w2_ref[0], preferred_element_type=jnp.float32) + y
    acc_ref[...] = z

    @pl.when(layer == pl.num_programs(1) - 1)
    def _():
        o_ref[0] = acc_ref[...].astype(o_ref.dtype)


def transformer_stack(p, stacked, num_heads):
    bsz, seq, c = p.shape
    num_layers = stacked['wq'].shape[0]

    def mat_spec():
        return pl.BlockSpec((1, c, c), lambda b, l: (l, 0, 0))

    def vec_spec():
        return pl.BlockSpec((1, 1, c), lambda b, l: (l, 0, 0))

    return pl.pallas_call(
        functools.partial(_tr_stack_kernel, num_heads=num_heads),
        out_shape=jax.ShapeDtypeStruct((bsz, seq, c), p.dtype),
        grid=(bsz, num_layers),
        in_specs=[pl.BlockSpec((1, seq, c), lambda b, l: (b, 0, 0)),
                  mat_spec(), mat_spec(), mat_spec(),
                  vec_spec(), vec_spec(), vec_spec(),
                  mat_spec(), vec_spec(), mat_spec(), mat_spec()],
        out_specs=pl.BlockSpec((1, seq, c), lambda b, l: (b, 0, 0)),
        scratch_shapes=[pltpu.VMEM((seq, c), jnp.float32)],
        compiler_params=pltpu.CompilerParams(
            dimension_semantics=("parallel", "arbitrary")),
    )(p, stacked['wq'], stacked['wk'], stacked['wv'],
      stacked['bq'], stacked['bk'], stacked['bv'],
      stacked['wo'], stacked['bo'], stacked['w1'], stacked['w2'])


# ---------------------------------------------------------------------------
# Parameters (deterministic, in-script; weights stored in matmul (in, out) layout)
# ---------------------------------------------------------------------------
def init_params(key, c1, c2, num_heads, num_layers):
    assert c2 % num_heads == 0
    keys = iter(jax.random.split(key, 4 + 13 * num_layers))

    def lin(cin, cout):
        return jax.random.normal(next(keys), (cin, cout), jnp.float32) / jnp.sqrt(float(cin))

    p = {'c1': c1, 'c2': c2}
    if c1 != c2:
        p['conv_w'] = lin(c1, c2)
        kg, kb, km, kv = jax.random.split(next(keys), 4)
        gamma = 1.0 + 0.1 * jax.random.normal(kg, (c2,), jnp.float32)
        beta = 0.1 * jax.random.normal(kb, (c2,), jnp.float32)
        mean = 0.1 * jax.random.normal(km, (c2,), jnp.float32)
        var = 1.0 + 0.5 * jax.random.uniform(kv, (c2,), jnp.float32)
        scale = gamma / jnp.sqrt(var + 1e-5)
        p['conv_s'] = scale.reshape(1, c2)
        p['conv_b'] = (beta - mean * scale).reshape(1, c2)
    else:
        next(keys); next(keys)  # keep the key schedule fixed
    p['lin_w'] = lin(c2, c2)
    p['lin_b'] = 0.1 * jax.random.normal(next(keys), (1, c2), jnp.float32)

    layers = []
    for _ in range(num_layers):
        layers.append({
            'wq_outer': lin(c2, c2), 'wk_outer': lin(c2, c2), 'wv_outer': lin(c2, c2),
            'wq_in': lin(c2, c2), 'wk_in': lin(c2, c2), 'wv_in': lin(c2, c2),
            'bq': 0.05 * jax.random.normal(next(keys), (c2,), jnp.float32),
            'bk': 0.05 * jax.random.normal(next(keys), (c2,), jnp.float32),
            'bv': 0.05 * jax.random.normal(next(keys), (c2,), jnp.float32),
            'wo': lin(c2, c2),
            'bo': 0.05 * jax.random.normal(next(keys), (c2,), jnp.float32),
            'w1': lin(c2, c2), 'w2': lin(c2, c2),
        })
    p['layers'] = layers
    return p


def fold_layer_params(layers):
    """Fold outer q/k/v Linear into the MHA in-projection; stack per layer."""
    def stack(fn):
        return jnp.stack([fn(lp) for lp in layers])
    return {
        'wq': stack(lambda lp: lp['wq_outer'] @ lp['wq_in']),
        'wk': stack(lambda lp: lp['wk_outer'] @ lp['wk_in']),
        'wv': stack(lambda lp: lp['wv_outer'] @ lp['wv_in']),
        'bq': stack(lambda lp: lp['bq'].reshape(1, -1)),
        'bk': stack(lambda lp: lp['bk'].reshape(1, -1)),
        'bv': stack(lambda lp: lp['bv'].reshape(1, -1)),
        'wo': stack(lambda lp: lp['wo']),
        'bo': stack(lambda lp: lp['bo'].reshape(1, -1)),
        'w1': stack(lambda lp: lp['w1']),
        'w2': stack(lambda lp: lp['w2']),
    }


# ---------------------------------------------------------------------------
# Forward (NCHW in, NCHW out) and pure-JAX reference
# ---------------------------------------------------------------------------
def transformer_block(x_nchw, params, num_heads):
    c1, c2 = params['c1'], params['c2']
    b, _, hh, ww = x_nchw.shape
    seq = hh * ww
    tokens = jnp.transpose(x_nchw, (0, 2, 3, 1)).reshape(b * seq, c1)  # (B*S, C1)
    if c1 != c2:
        p = conv_embed(tokens, params['conv_w'], params['conv_s'], params['conv_b'],
                       params['lin_w'], params['lin_b'])
    else:
        p = embed(tokens, params['lin_w'], params['lin_b'])
    p = p.reshape(b, seq, c2)
    stacked = fold_layer_params(params['layers'])
    out = transformer_stack(p, stacked, num_heads)                     # (B, S, C2)
    return jnp.transpose(out.reshape(b, hh, ww, c2), (0, 3, 1, 2))     # NCHW


def reference(x_nchw, params, num_heads):
    c1, c2 = params['c1'], params['c2']
    b, _, hh, ww = x_nchw.shape
    seq = hh * ww
    x = jnp.transpose(x_nchw, (0, 2, 3, 1)).reshape(b, seq, c1)
    if c1 != c2:
        h = x @ params['conv_w']
        h = h * params['conv_s'] + params['conv_b']
        p = h * jax.nn.sigmoid(h)
    else:
        p = x
    p = p + p @ params['lin_w'] + params['lin_b']
    dh = c2 // num_heads
    for lp in params['layers']:
        q = (p @ lp['wq_outer']) @ lp['wq_in'] + lp['bq']
        k = (p @ lp['wk_outer']) @ lp['wk_in'] + lp['bk']
        v = (p @ lp['wv_outer']) @ lp['wv_in'] + lp['bv']
        qh = q.reshape(b, seq, num_heads, dh) * (float(dh) ** -0.5)
        kh = k.reshape(b, seq, num_heads, dh)
        vh = v.reshape(b, seq, num_heads, dh)
        logits = jnp.einsum('bqhd,bkhd->bhqk', qh, kh)
        attn = jax.nn.softmax(logits, axis=-1)
        ctx = jnp.einsum('bhqk,bkhd->bqhd', attn, vh).reshape(b, seq, c2)
        y = ctx @ lp['wo'] + lp['bo'] + p
        p = (y @ lp['w1']) @ lp['w2'] + y
    return jnp.transpose(p.reshape(b, hh, ww, c2), (0, 3, 1, 2))


if __name__ == "__main__":
    key = jax.random.PRNGKey(0)
    kx, kp = jax.random.split(key)
    B, C1, C2, H, W = 2, 4, 32, 16, 16       # seq = H*W = 256
    NUM_HEADS, NUM_LAYERS = 4, 2

    x = jax.random.normal(kx, (B, C1, H, W), jnp.float32)
    params = init_params(kp, C1, C2, NUM_HEADS, NUM_LAYERS)

    out = jax.block_until_ready(transformer_block(x, params, NUM_HEADS))
    ref = reference(x, params, NUM_HEADS)

    assert out.shape == (B, C2, H, W), out.shape
    max_err = float(jnp.max(jnp.abs(out - ref)))
    assert jnp.allclose(out, ref, atol=5e-3, rtol=5e-3), max_err
    print("KERNEL_OK")
</pallas_src>

<mosaic_0001>
module attributes {stable_mosaic.version = 11 : i64} {
  func.func @_conv_embed_kernel(%arg0: i32, %arg1: memref<256x4xf32, #tpu.memory_space<vmem>>, %arg2: memref<4x32xf32, #tpu.memory_space<vmem>>, %arg3: memref<1x32xf32, #tpu.memory_space<vmem>>, %arg4: memref<1x32xf32, #tpu.memory_space<vmem>>, %arg5: memref<32x32xf32, #tpu.memory_space<vmem>>, %arg6: memref<1x32xf32, #tpu.memory_space<vmem>>, %arg7: memref<256x32xf32, #tpu.memory_space<vmem>>) attributes {dimension_semantics = [#tpu.dimension_semantics<parallel>], iteration_bounds = array<i64: 2>, scalar_prefetch = 0 : i64, scratch_operands = 0 : i64, tpu.core_type = #tpu.core_type<tc>, window_params = [{transform_indices = @transform_0, window_bounds = array<i64: 256, 4>}, {pipeline_mode = #tpu.pipeline_mode<synchronous>, transform_indices = @transform_1, window_bounds = array<i64: 4, 32>}, {pipeline_mode = #tpu.pipeline_mode<synchronous>, transform_indices = @transform_2, window_bounds = array<i64: 1, 32>}, {pipeline_mode = #tpu.pipeline_mode<synchronous>, transform_indices = @transform_3, window_bounds = array<i64: 1, 32>}, {pipeline_mode = #tpu.pipeline_mode<synchronous>, transform_indices = @transform_4, window_bounds = array<i64: 32, 32>}, {pipeline_mode = #tpu.pipeline_mode<synchronous>, transform_indices = @transform_5, window_bounds = array<i64: 1, 32>}, {transform_indices = @transform_6, window_bounds = array<i64: 256, 32>}]} {
    %c0 = arith.constant 0 : index
    %c0_0 = arith.constant 0 : index
    %0 = vector.load %arg1[%c0, %c0_0] : memref<256x4xf32, #tpu.memory_space<vmem>>, vector<256x4xf32>
    %c0_1 = arith.constant 0 : index
    %c0_2 = arith.constant 0 : index
    %1 = vector.load %arg2[%c0_1, %c0_2] : memref<4x32xf32, #tpu.memory_space<vmem>>, vector<4x32xf32>
    %cst = arith.constant dense<0.000000e+00> : vector<256x32xf32>
    %2 = tpu.matmul %0, %1, %cst {dimension_numbers = #tpu.dot_dimension_numbers<[1], [0], [0], [1], [0, 0, 1, 1], [], []>} : vector<256x4xf32>, vector<4x32xf32>, vector<256x32xf32> -> vector<256x32xf32>
    %c0_3 = arith.constant 0 : index
    %c0_4 = arith.constant 0 : index
    %3 = vector.load %arg3[%c0_3, %c0_4] : memref<1x32xf32, #tpu.memory_space<vmem>>, vector<1x32xf32>
    %4 = vector.broadcast %3 : vector<1x32xf32> to vector<256x32xf32>
    %5 = arith.mulf %2, %4 : vector<256x32xf32>
    %c0_5 = arith.constant 0 : index
    %c0_6 = arith.constant 0 : index
    %6 = vector.load %arg4[%c0_5, %c0_6] : memref<1x32xf32, #tpu.memory_space<vmem>>, vector<1x32xf32>
    %7 = vector.broadcast %6 : vector<1x32xf32> to vector<256x32xf32>
    %8 = arith.addf %5, %7 : vector<256x32xf32>
    %cst_7 = arith.constant 0.000000e+00 : f32
    %9 = vector.broadcast %cst_7 : f32 to vector<256x32xf32>
    %10 = arith.subf %9, %8 : vector<256x32xf32>
    %11 = math.exp %10 : vector<256x32xf32>
    %cst_8 = arith.constant 1.000000e+00 : f32
    %12 = vector.broadcast %cst_8 : f32 to vector<256x32xf32>
    %13 = arith.addf %12, %11 : vector<256x32xf32>
    %cst_9 = arith.constant 1.000000e+00 : f32
    %14 = vector.broadcast %cst_9 : f32 to vector<256x32xf32>
    %15 = arith.divf %14, %13 : vector<256x32xf32>
    %16 = arith.mulf %8, %15 : vector<256x32xf32>
    %c0_10 = arith.constant 0 : index
    %c0_11 = arith.constant 0 : index
    %17 = vector.load %arg5[%c0_10, %c0_11] : memref<32x32xf32, #tpu.memory_space<vmem>>, vector<32x32xf32>
    %cst_12 = arith.constant dense<0.000000e+00> : vector<256x32xf32>
    %18 = tpu.matmul %16, %17, %cst_12 {dimension_numbers = #tpu.dot_dimension_numbers<[1], [0], [0], [1], [0, 0, 1, 1], [], []>} : vector<256x32xf32>, vector<32x32xf32>, vector<256x32xf32> -> vector<256x32xf32>
    %19 = arith.addf %16, %18 : vector<256x32xf32>
    %c0_13 = arith.constant 0 : index
    %c0_14 = arith.constant 0 : index
    %20 = vector.load %arg6[%c0_13, %c0_14] : memref<1x32xf32, #tpu.memory_space<vmem>>, vector<1x32xf32>
    %21 = vector.broadcast %20 : vector<1x32xf32> to vector<256x32xf32>
    %22 = arith.addf %19, %21 : vector<256x32xf32>
    %c0_15 = arith.constant 0 : index
    %c0_16 = arith.constant 0 : index
    %23 = vector.load %arg7[%c0_15, %c0_16] : memref<256x32xf32, #tpu.memory_space<vmem>>, vector<256x32xf32>
    tpu.vector_store %arg7[%c0_15, %c0_16], %22 {strides = array<i32>} : memref<256x32xf32, #tpu.memory_space<vmem>>, vector<256x32xf32>,
    return
  }
  func.func @transform_0(%arg0: i32) -> (i32, i32) {
    %c0_i32 = arith.constant 0 : i32
    %c0_i32_0 = arith.constant 0 : i32
    return %arg0, %c0_i32 : i32, i32
  }
  func.func @transform_1(%arg0: i32) -> (i32, i32) {
    %c0_i32 = arith.constant 0 : i32
    %c0_i32_0 = arith.constant 0 : i32
    %c0_i32_1 = arith.constant 0 : i32
    return %c0_i32, %c0_i32_0 : i32, i32
  }
  func.func @transform_2(%arg0: i32) -> (i32, i32) {
    %c0_i32 = arith.constant 0 : i32
    %c0_i32_0 = arith.constant 0 : i32
    %c0_i32_1 = arith.constant 0 : i32
    return %c0_i32, %c0_i32_0 : i32, i32
  }
  func.func @transform_3(%arg0: i32) -> (i32, i32) {
    %c0_i32 = arith.constant 0 : i32
    %c0_i32_0 = arith.constant 0 : i32
    %c0_i32_1 = arith.constant 0 : i32
    return %c0_i32, %c0_i32_0 : i32, i32
  }
  func.func @transform_4(%arg0: i32) -> (i32, i32) {
    %c0_i32 = arith.constant 0 : i32
    %c0_i32_0 = arith.constant 0 : i32
    %c0_i32_1 = arith.constant 0 : i32
    return %c0_i32, %c0_i32_0 : i32, i32
  }
  func.func @transform_5(%arg0: i32) -> (i32, i32) {
    %c0_i32 = arith.constant 0 : i32
    %c0_i32_0 = arith.constant 0 : i32
    %c0_i32_1 = arith.constant 0 : i32
    return %c0_i32, %c0_i32_0 : i32, i32
  }
  func.func @transform_6(%arg0: i32) -> (i32, i32) {
    %c0_i32 = arith.constant 0 : i32
    %c0_i32_0 = arith.constant 0 : i32
    return %arg0, %c0_i32 : i32, i32
  }
}

</mosaic_0001>

<llo_original>
// kernel: tpu_custom_call.1
$region0: #{tpu_custom_call.1}
  #allocation0 [shape = 'u32[]', space=smem, size = 0x4, offset = 0x4, fixed_abs, tag = 'smem constant byte address 0x4 - core index']
  #allocation1 [shape = 'u32[144,128]{1,0:T(1,128)}', space=vmem, size = 0x12000, scoped, tag = 'internal scratch']
  %s0 = inlined_call_operand.vmem [shape: f32[512,4], index: 0, kind: input, shape index: {}]
  %s1 = inlined_call_operand.vmem [shape: f32[4,32], index: 1, kind: input, shape index: {}]
  %s2 = inlined_call_operand.vmem [shape: f32[1,32], index: 2, kind: input, shape index: {}]
  %s3 = inlined_call_operand.vmem [shape: f32[1,32], index: 3, kind: input, shape index: {}]
  %s4 = inlined_call_operand.vmem [shape: f32[32,32], index: 4, kind: input, shape index: {}]
  %s5 = inlined_call_operand.vmem [shape: f32[1,32], index: 5, kind: input, shape index: {}]
  %s6 = inlined_call_operand.vmem [shape: f32[512,32], index: 6, kind: output, shape index: {}]
  %s7 = sld [smem:[#allocation0]]
  $region57: #{tpu_custom_call.1} parent=0
    _
  %s9 = ssub.s32 1, %s7
  %s10 = scalar_select 0, %s9, %s7
  loop: start=0, step=1, limit=4
  $region2: #{tpu_custom_call.1} parent=0 // loop_pre_header
    _
  $region3: #{tpu_custom_call.1} parent=0 // loop_header
    %s12 = sphi 0, %s16
    %p13 = scmp.ge.s32.totalorder %s12, 4
    %s22 = sphi 0, %s24
    %s25 = sphi 0, %s22
    %s26 = sphi 0, %s25
    %s42 = sphi 0, %s26
    %s46 = sphi 0, %s46
    %s48 = sphi 0, %s46
    %s49 = sphi 0, %s48
    %s63 = sphi 0, %s49
    %s67 = sphi 0, %s67
    %s69 = sphi 0, %s67
    %s70 = sphi 0, %s69
    %s84 = sphi 0, %s70
    %s88 = sphi 0, %s88
    %s90 = sphi 0, %s88
    %s91 = sphi 0, %s90
    %s105 = sphi 0, %s91
    %s109 = sphi 0, %s109
    %s111 = sphi 0, %s109
    %s112 = sphi 0, %s111
    %s126 = sphi 0, %s112
    %s130 = sphi 0, %s130
    %s132 = sphi 0, %s130
    %s133 = sphi 0, %s132
    %s147 = sphi 0, %s133
    %s153 = sphi 0, %s155
    %s156 = sphi 0, %s153
    %s157 = sphi 0, %s156
    %s173 = sphi 0, %s157
  $region4: #{tpu_custom_call.1} parent=0 // loop_header_branch
    %15 = sbr.rel (%p13) target = $region8
  $region5: #{tpu_custom_call.1} parent=0 // loop_body
    %s17 = ssub.s32 %s12, 1
    %s18 = ssub.s32 %s12, 2
    %s19 = sadd.s32 %s12, 1
    %s20 = ssub.s32 %s12, %s19
    %p21 = scmp.eq.s32.totalorder %s20, 0
    %s23 = sadd.s32 %s22, 1
    %s24 = scalar_select %p21, %s22, %s23
    %p27 = pneg %p21
    %p28 = scmp.eq.s32.totalorder %s12, 1
    %p29 = por %p27, %p28
    %p30 = scmp.ne.s32.totalorder %s22, %s25
    %p31 = scmp.eq.s32.totalorder %s12, 0
    %p32 = por %p30, %p31
    %p33 = scmp.ne.s32.totalorder %s22, %s25
    %p34 = scmp.eq.s32.totalorder %s17, 1
    %p35 = por %p33, %p34
    %p36 = scmp.ne.s32.totalorder %s25, %s26
    %p37 = scmp.eq.s32.totalorder %s17, 0
    %p38 = por %p36, %p37
    %p39 = scmp.ne.s32.totalorder %s25, %s26
    %p40 = scmp.eq.s32.totalorder %s18, 1
    %p41 = por %p39, %p40
    %p43 = scmp.ne.s32.totalorder %s26, %s42
    %p44 = scmp.eq.s32.totalorder %s18, 0
    %p45 = por %p43, %p44
    %s47 = sadd.s32 %s46, 1
    %p50 = scmp.eq.s32.totalorder %s12, 1
    %p51 = scmp.ne.s32.totalorder %s46, %s48
    %p52 = scmp.eq.s32.totalorder %s12, 0
    %p53 = por %p51, %p52
    %p54 = scmp.ne.s32.totalorder %s46, %s48
    %p55 = scmp.eq.s32.totalorder %s17, 1
    %p56 = por %p54, %p55
    %p57 = scmp.ne.s32.totalorder %s48, %s49
    %p58 = scmp.eq.s32.totalorder %s17, 0
    %p59 = por %p57, %p58
    %p60 = scmp.ne.s32.totalorder %s48, %s49
    %p61 = scmp.eq.s32.totalorder %s18, 1
    %p62 = por %p60, %p61
    %p64 = scmp.ne.s32.totalorder %s49, %s63
    %p65 = scmp.eq.s32.totalorder %s18, 0
    %p66 = por %p64, %p65
    %s68 = sadd.s32 %s67, 1
    %p71 = scmp.eq.s32.totalorder %s12, 1
    %p72 = scmp.ne.s32.totalorder %s67, %s69
    %p73 = scmp.eq.s32.totalorder %s12, 0
    %p74 = por %p72, %p73
    %p75 = scmp.ne.s32.totalorder %s67, %s69
    %p76 = scmp.eq.s32.totalorder %s17, 1
    %p77 = por %p75, %p76
    %p78 = scmp.ne.s32.totalorder %s69, %s70
    %p79 = scmp.eq.s32.totalorder %s17, 0
    %p80 = por %p78, %p79
    %p81 = scmp.ne.s32.totalorder %s69, %s70
    %p82 = scmp.eq.s32.totalorder %s18, 1
    %p83 = por %p81, %p82
    %p85 = scmp.ne.s32.totalorder %s70, %s84
    %p86 = scmp.eq.s32.totalorder %s18, 0
    %p87 = por %p85, %p86
    %s89 = sadd.s32 %s88, 1
    %p92 = scmp.eq.s32.totalorder %s12, 1
    %p93 = scmp.ne.s32.totalorder %s88, %s90
    %p94 = scmp.eq.s32.totalorder %s12, 0
    %p95 = por %p93, %p94
    %p96 = scmp.ne.s32.totalorder %s88, %s90
    %p97 = scmp.eq.s32.totalorder %s17, 1
    %p98 = por %p96, %p97
    %p99 = scmp.ne.s32.totalorder %s90, %s91
    %p100 = scmp.eq.s32.totalorder %s17, 0
    %p101 = por %p99, %p100
    %p102 = scmp.ne.s32.totalorder %s90, %s91
    %p103 = scmp.eq.s32.totalorder %s18, 1
    %p104 = por %p102, %p103
    %p106 = scmp.ne.s32.totalorder %s91, %s105
    %p107 = scmp.eq.s32.totalorder %s18, 0
    %p108 = por %p106, %p107
    %s110 = sadd.s32 %s109, 1
    %p113 = scmp.eq.s32.totalorder %s12, 1
    %p114 = scmp.ne.s32.totalorder %s109, %s111
    %p115 = scmp.eq.s32.totalorder %s12, 0
    %p116 = por %p114, %p115
    %p117 = scmp.ne.s32.totalorder %s109, %s111
    %p118 = scmp.eq.s32.totalorder %s17, 1
    %p119 = por %p117, %p118
    %p120 = scmp.ne.s32.totalorder %s111, %s112
    %p121 = scmp.eq.s32.totalorder %s17, 0
    %p122 = por %p120, %p121
    %p123 = scmp.ne.s32.totalorder %s111, %s112
    %p124 = scmp.eq.s32.totalorder %s18, 1
    %p125 = por %p123, %p124
    %p127 = scmp.ne.s32.totalorder %s112, %s126
    %p128 = scmp.eq.s32.totalorder %s18, 0
    %p129 = por %p127, %p128
    %s131 = sadd.s32 %s130, 1
    %p134 = scmp.eq.s32.totalorder %s12, 1
    %p135 = scmp.ne.s32.totalorder %s130, %s132
    %p136 = scmp.eq.s32.totalorder %s12, 0
    %p137 = por %p135, %p136
    %p138 = scmp.ne.s32.totalorder %s130, %s132
    %p139 = scmp.eq.s32.totalorder %s17, 1
    %p140 = por %p138, %p139
    %p141 = scmp.ne.s32.totalorder %s132, %s133
    %p142 = scmp.eq.s32.totalorder %s17, 0
    %p143 = por %p141, %p142
    %p144 = scmp.ne.s32.totalorder %s132, %s133
    %p145 = scmp.eq.s32.totalorder %s18, 1
    %p146 = por %p144, %p145
    %p148 = scmp.ne.s32.totalorder %s133, %s147
    %p149 = scmp.eq.s32.totalorder %s18, 0
    %p150 = por %p148, %p149
    %s151 = ssub.s32 %s12, %s19
    %p152 = scmp.eq.s32.totalorder %s151, 0
    %s154 = sadd.s32 %s153, 1
    %s155 = scalar_select %p152, %s153, %s154
    %p158 = pneg %p152
    %p159 = scmp.eq.s32.totalorder %s12, 1
    %p160 = por %p158, %p159
    %p161 = scmp.ne.s32.totalorder %s153, %s156
    %p162 = scmp.eq.s32.totalorder %s12, 0
    %p163 = por %p161, %p162
    %p164 = scmp.ne.s32.totalorder %s153, %s156
    %p165 = scmp.eq.s32.totalorder %s17, 1
    %p166 = por %p164, %p165
    %p167 = scmp.ne.s32.totalorder %s156, %s157
    %p168 = scmp.eq.s32.totalorder %s17, 0
    %p169 = por %p167, %p168
    %p170 = scmp.ne.s32.totalorder %s156, %s157
    %p171 = scmp.eq.s32.totalorder %s18, 1
    %p172 = por %p170, %p171
    %p174 = scmp.ne.s32.totalorder %s157, %s173
    %p175 = scmp.eq.s32.totalorder %s18, 0
    %p176 = por %p174, %p175
    %p177 = scmp.le.s32.totalorder 1, %s12
    %p178 = scmp.lt.s32.totalorder %s12, 3
    %p179 = pnand %p177, %p178
    %p180 = pneg %p179
    // Predicated region
    $region9: #{tpu_custom_call.1} parent=5 // pred_check
      _
    $region10: #{tpu_custom_call.1} parent=5 // pred_check_branch
      %182 = sbr.rel (%p179) target = $region12
    $region11: #{tpu_custom_call.1} parent=5 // pred_region
      %s183 = ssub.s32 %s12, 1
      // Predicated region
      $region13: #{tpu_custom_call.1} parent=11 // pred_check
        %p184 = pneg %p59
      $region14: #{tpu_custom_call.1} parent=11 // pred_check_branch
        %186 = sbr.rel (%p184) target = $region16
      $region15: #{tpu_custom_call.1} parent=11 // pred_region
        _
      $region16: #{tpu_custom_call.1} parent=11 // pred_fallthru
        _
      // Predicated region
      $region17: #{tpu_custom_call.1} parent=11 // pred_check
        %p187 = pneg %p80
      $region18: #{tpu_custom_call.1} parent=11 // pred_check_branch
        %189 = sbr.rel (%p187) target = $region20
      $region19: #{tpu_custom_call.1} parent=11 // pred_region
        _
      $region20: #{tpu_custom_call.1} parent=11 // pred_fallthru
        _
      // Predicated region
      $region21: #{tpu_custom_call.1} parent=11 // pred_check
        %p190 = pneg %p101
      $region22: #{tpu_custom_call.1} parent=11 // pred_check_branch
        %192 = sbr.rel (%p190) target = $region24
      $region23: #{tpu_custom_call.1} parent=11 // pred_region
        _
      $region24: #{tpu_custom_call.1} parent=11 // pred_fallthru
        _
      // Predicated region
      $region25: #{tpu_custom_call.1} parent=11 // pred_check
        %p193 = pneg %p122
      $region26: #{tpu_custom_call.1} parent=11 // pred_check_branch
        %195 = sbr.rel (%p193) target = $region28
      $region27: #{tpu_custom_call.1} parent=11 // pred_region
        _
      $region28: #{tpu_custom_call.1} parent=11 // pred_fallthru
        _
      // Predicated region
      $region29: #{tpu_custom_call.1} parent=11 // pred_check
        %p196 = pneg %p143
      $region30: #{tpu_custom_call.1} parent=11 // pred_check_branch
        %198 = sbr.rel (%p196) target = $region32
      $region31: #{tpu_custom_call.1} parent=11 // pred_region
        _
      $region32: #{tpu_custom_call.1} parent=11 // pred_fallthru
        _
    $region12: #{tpu_custom_call.1} parent=5 // pred_fallthru
      _
    %p199 = scmp.lt.s32.totalorder %s12, 2
    // Predicated region
    $region33: #{tpu_custom_call.1} parent=5 // pred_check
      %p200 = pneg %p199
    $region34: #{tpu_custom_call.1} parent=5 // pred_check_branch
      %202 = sbr.rel (%p200) target = $region36
    $region35: #{tpu_custom_call.1} parent=5 // pred_region
      // Predicated region
      $region37: #{tpu_custom_call.1} parent=35 // pred_check
        %p203 = pneg %p32
      $region38: #{tpu_custom_call.1} parent=35 // pred_check_branch
        %205 = sbr.rel (%p203) target = $region40
      $region39: #{tpu_custom_call.1} parent=35 // pred_region
        %s206 = smul.u32 32, %s12
        %p207 = scmp.lt.s32.totalorder %s206, 63
        %s208 = scalar_select %p207, %s206, 63
        %s209 = smul.addr %s208, 8
        %s210 = scalar_lea.vmem %s0, %s209
        %s211 = smul.u32 32, %s12
      $region40: #{tpu_custom_call.1} parent=35 // pred_fallthru
        _
    $region36: #{tpu_custom_call.1} parent=5 // pred_fallthru
      _
    %p212 = scmp.le.s32.totalorder 1, %s12
    %p213 = scmp.lt.s32.totalorder %s12, 3
    %p214 = pnand %p212, %p213
    %p215 = pneg %p214
    // Predicated region
    $region41: #{tpu_custom_call.1} parent=5 // pred_check
      _
    $region42: #{tpu_custom_call.1} parent=5 // pred_check_branch
      %217 = sbr.rel (%p214) target = $region44
    $region43: #{tpu_custom_call.1} parent=5 // pred_region
      %s218 = ssub.s32 %s12, 1
      %s219 = smul.u32 32, %s17
      %p220 = scmp.lt.s32.totalorder %s219, 63
      %s221 = scalar_select %p220, %s219, 63
      %s222 = smul.addr %s221, 8
      %s223 = scalar_lea.vmem %s0, %s222
      %p224 = pneg %p38
      %p225 = pneg %p35
      %p226 = pneg %p59
      %p227 = pneg %p56
      %p228 = pneg %p80
      %p229 = pneg %p77
      %p230 = pneg %p101
      %p231 = pneg %p98
      %p232 = pneg %p122
      %p233 = pneg %p119
      %p234 = pneg %p143
      %p235 = pneg %p140
      %p236 = pneg %p169
      %p237 = pneg %p166
      %s238 = smul.u32 32, %s17
      %p239 = scmp.lt.s32.totalorder %s238, 63
      %s240 = scalar_select %p239, %s238, 63
      %s241 = smul.addr %s240, 8
      %s242 = scalar_lea.vmem %s6, %s241
      %s243 = smul.u32 32, %s17
      %p244 = scmp.lt.s32.totalorder %s243, 63
      %s245 = scalar_select %p244, %s243, 63
      %s246 = smul.addr %s245, 8
      %s247 = scalar_lea.vmem %s0, %s246
      %s248 = smul.u32 32, %s17
      %s249 = smul.u32 32, %s17
      %p250 = scmp.lt.s32.totalorder %s249, 63
      %s251 = scalar_select %p250, %s249, 63
      %s252 = smul.addr %s251, 8
      %s253 = scalar_lea.vmem %s6, %s252
      %s254 = smul.u32 32, %s17
      %v255 = vld [vmem:[%s247] sm:$0xff]
      %v256 = vld [vmem:[%s247 + $0x8] sm:$0xff]
      %v257 = vld [vmem:[%s247 + $0x10] sm:$0xff]
      %v258 = vld [vmem:[%s247 + $0x18] sm:$0xff]
      %v259 = vld [vmem:[%s247 + $0x20] sm:$0xff]
      %v260 = vld [vmem:[%s247 + $0x28] sm:$0xff]
      %v261 = vld [vmem:[%s247 + $0x30] sm:$0xff]
      %v262 = vld [vmem:[%s247 + $0x38] sm:$0xff]
      %v263 = vld [vmem:[%s247 + $0x40] sm:$0xff]
      %v264 = vld [vmem:[%s247 + $0x48] sm:$0xff]
      %v265 = vld [vmem:[%s247 + $0x50] sm:$0xff]
      %v266 = vld [vmem:[%s247 + $0x58] sm:$0xff]
      %v267 = vld [vmem:[%s247 + $0x60] sm:$0xff]
      %v268 = vld [vmem:[%s247 + $0x68] sm:$0xff]
      %v269 = vld [vmem:[%s247 + $0x70] sm:$0xff]
      %v270 = vld [vmem:[%s247 + $0x78] sm:$0xff]
      %v271 = vld [vmem:[%s247 + $0x80] sm:$0xff]
      %v272 = vld [vmem:[%s247 + $0x88] sm:$0xff]
      %v273 = vld [vmem:[%s247 + $0x90] sm:$0xff]
      %v274 = vld [vmem:[%s247 + $0x98] sm:$0xff]
      %v275 = vld [vmem:[%s247 + $0xa0] sm:$0xff]
      %v276 = vld [vmem:[%s247 + $0xa8] sm:$0xff]
      %v277 = vld [vmem:[%s247 + $0xb0] sm:$0xff]
      %v278 = vld [vmem:[%s247 + $0xb8] sm:$0xff]
      %v279 = vld [vmem:[%s247 + $0xc0] sm:$0xff]
      %v280 = vld [vmem:[%s247 + $0xc8] sm:$0xff]
      %v281 = vld [vmem:[%s247 + $0xd0] sm:$0xff]
      %v282 = vld [vmem:[%s247 + $0xd8] sm:$0xff]
      %v283 = vld [vmem:[%s247 + $0xe0] sm:$0xff]
      %v284 = vld [vmem:[%s247 + $0xe8] sm:$0xff]
      %v285 = vld [vmem:[%s247 + $0xf0] sm:$0xff]
      %v286 = vld [vmem:[%s247 + $0xf8] sm:$0xff]
      %v287 = vld [vmem:[%s1] sm:$0xf]
      %vm288 = vcmask 31744
      %v290 = vsel %vm288, %v255, 0
      %v293 = vsel %vm288, %v256, 0
      %v296 = vsel %vm288, %v257, 0
      %v299 = vsel %vm288, %v258, 0
      %v302 = vsel %vm288, %v259, 0
      %v305 = vsel %vm288, %v260, 0
      %v308 = vsel %vm288, %v261, 0
      %v311 = vsel %vm288, %v262, 0
      %v314 = vsel %vm288, %v263, 0
      %v317 = vsel %vm288, %v264, 0
      %v320 = vsel %vm288, %v265, 0
      %v323 = vsel %vm288, %v266, 0
      %v326 = vsel %vm288, %v267, 0
      %v329 = vsel %vm288, %v268, 0
      %v332 = vsel %vm288, %v269, 0
      %v335 = vsel %vm288, %v270, 0
      %v338 = vsel %vm288, %v271, 0
      %v341 = vsel %vm288, %v272, 0
      %v344 = vsel %vm288, %v273, 0
      %v347 = vsel %vm288, %v274, 0
      %v350 = vsel %vm288, %v275, 0
      %v353 = vsel %vm288, %v276, 0
      %v356 = vsel %vm288, %v277, 0
      %v359 = vsel %vm288, %v278, 0
      %v362 = vsel %vm288, %v279, 0
      %v365 = vsel %vm288, %v280, 0
      %v368 = vsel %vm288, %v281, 0
      %v371 = vsel %vm288, %v282, 0
      %v374 = vsel %vm288, %v283, 0
      %v377 = vsel %vm288, %v284, 0
      %v380 = vsel %vm288, %v285, 0
      %v383 = vsel %vm288, %v286, 0
      %vm385 = vcmask 1043456
      %v387 = vsel %vm385, %v287, 0
      %389 = vmatprep.subr.mxu0 0.0
      %390 = vmatpush1.msra.mxu0 %v387
      %391 = vmatprep.subr.mxu0 0.0
      %392 = vmatpush1.msra.mxu0 0.0
      %393 = vmatprep.subr.mxu0 0.0
      %394 = vmatpush1.msra.mxu0 0.0
      %395 = vmatprep.subr.mxu0 0.0
      %396 = vmatpush1.msra.mxu0 0.0
      %397 = vmatprep.subr.mxu0 0.0
      %398 = vmatpush1.msra.mxu0 0.0
      %399 = vmatprep.subr.mxu0 0.0
      %400 = vmatpush1.msra.mxu0 0.0
      %401 = vmatprep.subr.mxu0 0.0
      %402 = vmatpush1.msra.mxu0 0.0
      %403 = vmatprep.subr.mxu0 0.0
      %404 = vmatpush1.msra.mxu0 0.0
      %405 = vmatprep.subr.mxu0 0.0
      %406 = vmatpush1.msra.mxu0 0.0
      %407 = vmatprep.subr.mxu0 0.0
      %408 = vmatpush1.msra.mxu0 0.0
      %409 = vmatprep.subr.mxu0 0.0
      %410 = vmatpush1.msra.mxu0 0.0
      %411 = vmatprep.subr.mxu0 0.0
      %412 = vmatpush1.msra.mxu0 0.0
      %413 = vmatprep.subr.mxu0 0.0
      %414 = vmatpush1.msra.mxu0 0.0
      %415 = vmatprep.subr.mxu0 0.0
      %416 = vmatpush1.msra.mxu0 0.0
      %417 = vmatprep.subr.mxu0 0.0
      %418 = vmatpush1.msra.mxu0 0.0
      %419 = vmatprep.subr.mxu0 0.0
      %420 = vmatpush1.msra.mxu0 0.0
      %421 = vmatprep.subr.mxu0 0.0
      %422 = vmatpush1.msra.mxu0 0.0
      %423 = vmatprep.subr.mxu0 0.0
      %424 = vmatpush1.msra.mxu0 0.0
      %425 = vmatprep.subr.mxu0 0.0
      %426 = vmatpush1.msra.mxu0 0.0
      %427 = vmatprep.subr.mxu0 0.0
      %428 = vmatpush1.msra.mxu0 0.0
      %429 = vmatprep.subr.mxu0 0.0
      %430 = vmatpush1.msra.mxu0 0.0
      %431 = vmatprep.subr.mxu0 0.0
      %432 = vmatpush1.msra.mxu0 0.0
      %433 = vmatprep.subr.mxu0 0.0
      %434 = vmatpush1.msra.mxu0 0.0
      %435 = vmatprep.subr.mxu0 0.0
      %436 = vmatpush1.msra.mxu0 0.0
      %437 = vmatprep.subr.mxu0 0.0
      %438 = vmatpush1.msra.mxu0 0.0
      %439 = vmatprep.subr.mxu0 0.0
      %440 = vmatpush1.msra.mxu0 0.0
      %441 = vmatprep.subr.mxu0 0.0
      %442 = vmatpush1.msra.mxu0 0.0
      %443 = vmatprep.subr.mxu0 0.0
      %444 = vmatpush1.msra.mxu0 0.0
      %445 = vmatprep.subr.mxu0 0.0
      %446 = vmatpush1.msra.mxu0 0.0
      %447 = vmatprep.subr.mxu0 0.0
      %448 = vmatpush1.msra.mxu0 0.0
      %449 = vmatprep.subr.mxu0 0.0
      %450 = vmatpush1.msra.mxu0 0.0
      %451 = vmatprep.subr.mxu0 0.0
      %452 = vmatpush1.msra.mxu0 0.0
      %453 = vmatprep.mubr.f32.mxu0 0.0
      %454 = vmatmul.mubr.f32.gmra.mrb[0].mxu0 %v290
      %v455 = vpop.f32.mrb[0].mxu0
      %v456 = vadd.f32 0.0, %v455
      %v457 = vpop.f32.mrb[0].mxu0
      %458 = vmatprep.mubr.f32.mxu0 0.0
      %459 = vmatmul.mubr.f32.gmra.mrb[0].mxu0 %v293
      %v460 = vpop.f32.mrb[0].mxu0
      %v461 = vadd.f32 0.0, %v460
      %v462 = vpop.f32.mrb[0].mxu0
      %463 = vmatprep.mubr.f32.mxu0 0.0
      %464 = vmatmul.mubr.f32.gmra.mrb[0].mxu0 %v296
      %v465 = vpop.f32.mrb[0].mxu0
      %v466 = vadd.f32 0.0, %v465
      %v467 = vpop.f32.mrb[0].mxu0
      %468 = vmatprep.mubr.f32.mxu0 0.0
      %469 = vmatmul.mubr.f32.gmra.mrb[0].mxu0 %v299
      %v470 = vpop.f32.mrb[0].mxu0
      %v471 = vadd.f32 0.0, %v470
      %v472 = vpop.f32.mrb[0].mxu0
      %473 = vmatprep.mubr.f32.mxu0 0.0
      %474 = vmatmul.mubr.f32.gmra.mrb[0].mxu0 %v302
      %v475 = vpop.f32.mrb[0].mxu0
      %v476 = vadd.f32 0.0, %v475
      %v477 = vpop.f32.mrb[0].mxu0
      %478 = vmatprep.mubr.f32.mxu0 0.0
      %479 = vmatmul.mubr.f32.gmra.mrb[0].mxu0 %v305
      %v480 = vpop.f32.mrb[0].mxu0
      %v481 = vadd.f32 0.0, %v480
      %v482 = vpop.f32.mrb[0].mxu0
      %483 = vmatprep.mubr.f32.mxu0 0.0
      %484 = vmatmul.mubr.f32.gmra.mrb[0].mxu0 %v308
      %v485 = vpop.f32.mrb[0].mxu0
      %v486 = vadd.f32 0.0, %v485
      %v487 = vpop.f32.mrb[0].mxu0
      %488 = vmatprep.mubr.f32.mxu0 0.0
      %489 = vmatmul.mubr.f32.gmra.mrb[0].mxu0 %v311
      %v490 = vpop.f32.mrb[0].mxu0
      %v491 = vadd.f32 0.0, %v490
      %v492 = vpop.f32.mrb[0].mxu0
      %493 = vmatprep.mubr.f32.mxu0 0.0
      %494 = vmatmul.mubr.f32.gmra.mrb[0].mxu0 %v314
      %v495 = vpop.f32.mrb[0].mxu0
      %v496 = vadd.f32 0.0, %v495
      %v497 = vpop.f32.mrb[0].mxu0
      %498 = vmatprep.mubr.f32.mxu0 0.0
      %499 = vmatmul.mubr.f32.gmra.mrb[0].mxu0 %v317
      %v500 = vpop.f32.mrb[0].mxu0
      %v501 = vadd.f32 0.0, %v500
      %v502 = vpop.f32.mrb[0].mxu0
      %503 = vmatprep.mubr.f32.mxu0 0.0
      %504 = vmatmul.mubr.f32.gmra.mrb[0].mxu0 %v320
      %v505 = vpop.f32.mrb[0].mxu0
      %v506 = vadd.f32 0.0, %v505
      %v507 = vpop.f32.mrb[0].mxu0
      %508 = vmatprep.mubr.f32.mxu0 0.0
      %509 = vmatmul.mubr.f32.gmra.mrb[0].mxu0 %v323
      %v510 = vpop.f32.mrb[0].mxu0
      %v511 = vadd.f32 0.0, %v510
      %v512 = vpop.f32.mrb[0].mxu0
      %513 = vmatprep.mubr.f32.mxu0 0.0
      %514 = vmatmul.mubr.f32.gmra.mrb[0].mxu0 %v326
      %v515 = vpop.f32.mrb[0].mxu0
      %v516 = vadd.f32 0.0, %v515
      %v517 = vpop.f32.mrb[0].mxu0
      %518 = vmatprep.mubr.f32.mxu0 0.0
      %519 = vmatmul.mubr.f32.gmra.mrb[0].mxu0 %v329
      %v520 = vpop.f32.mrb[0].mxu0
      %v521 = vadd.f32 0.0, %v520
      %v522 = vpop.f32.mrb[0].mxu0
      %523 = vmatprep.mubr.f32.mxu0 0.0
      %524 = vmatmul.mubr.f32.gmra.mrb[0].mxu0 %v332
      %v525 = vpop.f32.mrb[0].mxu0
      %v526 = vadd.f32 0.0, %v525
      %v527 = vpop.f32.mrb[0].mxu0
      %528 = vmatprep.mubr.f32.mxu0 0.0
      %529 = vmatmul.mubr.f32.gmra.mrb[0].mxu0 %v335
      %v530 = vpop.f32.mrb[0].mxu0
      %v531 = vadd.f32 0.0, %v530
      %v532 = vpop.f32.mrb[0].mxu0
      %533 = vmatprep.mubr.f32.mxu0 0.0
      %534 = vmatmul.mubr.f32.gmra.mrb[0].mxu0 %v338
      %v535 = vpop.f32.mrb[0].mxu0
      %v536 = vadd.f32 0.0, %v535
      %v537 = vpop.f32.mrb[0].mxu0
      %538 = vmatprep.mubr.f32.mxu0 0.0
      %539 = vmatmul.mubr.f32.gmra.mrb[0].mxu0 %v341
      %v540 = vpop.f32.mrb[0].mxu0
      %v541 = vadd.f32 0.0, %v540
      %v542 = vpop.f32.mrb[0].mxu0
      %543 = vmatprep.mubr.f32.mxu0 0.0
      %544 = vmatmul.mubr.f32.gmra.mrb[0].mxu0 %v344
      %v545 = vpop.f32.mrb[0].mxu0
      %v546 = vadd.f32 0.0, %v545
      %v547 = vpop.f32.mrb[0].mxu0
      %548 = vmatprep.mubr.f32.mxu0 0.0
      %549 = vmatmul.mubr.f32.gmra.mrb[0].mxu0 %v347
      %v550 = vpop.f32.mrb[0].mxu0
      %v551 = vadd.f32 0.0, %v550
      %v552 = vpop.f32.mrb[0].mxu0
      %553 = vmatprep.mubr.f32.mxu0 0.0
      %554 = vmatmul.mubr.f32.gmra.mrb[0].mxu0 %v350
      %v555 = vpop.f32.mrb[0].mxu0
      %v556 = vadd.f32 0.0, %v555
      %v557 = vpop.f32.mrb[0].mxu0
      %558 = vmatprep.mubr.f32.mxu0 0.0
      %559 = vmatmul.mubr.f32.gmra.mrb[0].mxu0 %v353
      %v560 = vpop.f32.mrb[0].mxu0
      %v561 = vadd.f32 0.0, %v560
      %v562 = vpop.f32.mrb[0].mxu0
      %563 = vmatprep.mubr.f32.mxu0 0.0
      %564 = vmatmul.mubr.f32.gmra.mrb[0].mxu0 %v356
      %v565 = vpop.f32.mrb[0].mxu0
      %v566 = vadd.f32 0.0, %v565
      %v567 = vpop.f32.mrb[0].mxu0
      %568 = vmatprep.mubr.f32.mxu0 0.0
      %569 = vmatmul.mubr.f32.gmra.mrb[0].mxu0 %v359
      %v570 = vpop.f32.mrb[0].mxu0
      %v571 = vadd.f32 0.0, %v570
      %v572 = vpop.f32.mrb[0].mxu0
      %573 = vmatprep.mubr.f32.mxu0 0.0
      %574 = vmatmul.mubr.f32.gmra.mrb[0].mxu0 %v362
      %v575 = vpop.f32.mrb[0].mxu0
      %v576 = vadd.f32 0.0, %v575
      %v577 = vpop.f32.mrb[0].mxu0
      %578 = vmatprep.mubr.f32.mxu0 0.0
      %579 = vmatmul.mubr.f32.gmra.mrb[0].mxu0 %v365
      %v580 = vpop.f32.mrb[0].mxu0
      %v581 = vadd.f32 0.0, %v580
      %v582 = vpop.f32.mrb[0].mxu0
      %583 = vmatprep.mubr.f32.mxu0 0.0
      %584 = vmatmul.mubr.f32.gmra.mrb[0].mxu0 %v368
      %v585 = vpop.f32.mrb[0].mxu0
      %v586 = vadd.f32 0.0, %v585
      %v587 = vpop.f32.mrb[0].mxu0
      %588 = vmatprep.mubr.f32.mxu0 0.0
      %589 = vmatmul.mubr.f32.gmra.mrb[0].mxu0 %v371
      %v590 = vpop.f32.mrb[0].mxu0
      %v591 = vadd.f32 0.0, %v590
      %v592 = vpop.f32.mrb[0].mxu0
      %593 = vmatprep.mubr.f32.mxu0 0.0
      %594 = vmatmul.mubr.f32.gmra.mrb[0].mxu0 %v374
      %v595 = vpop.f32.mrb[0].mxu0
      %v596 = vadd.f32 0.0, %v595
      %v597 = vpop.f32.mrb[0].mxu0
      %598 = vmatprep.mubr.f32.mxu0 0.0
      %599 = vmatmul.mubr.f32.gmra.mrb[0].mxu0 %v377
      %v600 = vpop.f32.mrb[0].mxu0
      %v601 = vadd.f32 0.0, %v600
      %v602 = vpop.f32.mrb[0].mxu0
      %603 = vmatprep.mubr.f32.mxu0 0.0
      %604 = vmatmul.mubr.f32.gmra.mrb[0].mxu0 %v380
      %v605 = vpop.f32.mrb[0].mxu0
      %v606 = vadd.f32 0.0, %v605
      %v607 = vpop.f32.mrb[0].mxu0
      %608 = vmatprep.mubr.f32.mxu0 0.0
      %609 = vmatmul.mubr.f32.gmra.mrb[0].mxu0 %v383
      %v610 = vpop.f32.mrb[0].mxu0
      %v611 = vadd.f32 0.0, %v610
      %v612 = vpop.f32.mrb[0].mxu0
      %613 = vdwg.mxu0
      %v614 = vld [vmem:[%s2] sm:$0x1]
      %v616 = vlaneseq
      %v617 = vshrl.u32 %v616, 7
      %v618 = vsub.s32 0, %v617
      %v619 = vrot.slane %v614, %v618
      %v621 = vmul.f32 %v456, %v619
      %v622 = vmul.f32 %v461, %v619
      %v623 = vmul.f32 %v466, %v619
      %v624 = vmul.f32 %v471, %v619
      %v625 = vmul.f32 %v476, %v619
      %v626 = vmul.f32 %v481, %v619
      %v627 = vmul.f32 %v486, %v619
      %v628 = vmul.f32 %v491, %v619
      %v629 = vmul.f32 %v496, %v619
      %v630 = vmul.f32 %v501, %v619
      %v631 = vmul.f32 %v506, %v619
      %v632 = vmul.f32 %v511, %v619
      %v633 = vmul.f32 %v516, %v619
      %v634 = vmul.f32 %v521, %v619
      %v635 = vmul.f32 %v526, %v619
      %v636 = vmul.f32 %v531, %v619
      %v637 = vmul.f32 %v536, %v619
      %v638 = vmul.f32 %v541, %v619
      %v639 = vmul.f32 %v546, %v619
      %v640 = vmul.f32 %v551, %v619
      %v641 = vmul.f32 %v556, %v619
      %v642 = vmul.f32 %v561, %v619
      %v643 = vmul.f32 %v566, %v619
      %v644 = vmul.f32 %v571, %v619
      %v645 = vmul.f32 %v576, %v619
      %v646 = vmul.f32 %v581, %v619
      %v647 = vmul.f32 %v586, %v619
      %v648 = vmul.f32 %v591, %v619
      %v649 = vmul.f32 %v596, %v619
      %v650 = vmul.f32 %v601, %v619
      %v651 = vmul.f32 %v606, %v619
      %v652 = vmul.f32 %v611, %v619
      %v653 = vld [vmem:[%s3] sm:$0x1]
      %v655 = vlaneseq
      %v656 = vshrl.u32 %v655, 7
      %v657 = vsub.s32 0, %v656
      %v658 = vrot.slane %v653, %v657
      %v660 = vadd.f32 %v621, %v658
      %v661 = vadd.f32 %v622, %v658
      %v662 = vadd.f32 %v623, %v658
      %v663 = vadd.f32 %v624, %v658
      %v664 = vadd.f32 %v625, %v658
      %v665 = vadd.f32 %v626, %v658
      %v666 = vadd.f32 %v627, %v658
      %v667 = vadd.f32 %v628, %v658
      %v668 = vadd.f32 %v629, %v658
      %v669 = vadd.f32 %v630, %v658
      %v670 = vadd.f32 %v631, %v658
      %v671 = vadd.f32 %v632, %v658
      %v672 = vadd.f32 %v633, %v658
      %v673 = vadd.f32 %v634, %v658
      %v674 = vadd.f32 %v635, %v658
      %v675 = vadd.f32 %v636, %v658
      %v676 = vadd.f32 %v637, %v658
      %v677 = vadd.f32 %v638, %v658
      %v678 = vadd.f32 %v639, %v658
      %v679 = vadd.f32 %v640, %v658
      %v680 = vadd.f32 %v641, %v658
      %v681 = vadd.f32 %v642, %v658
      %v682 = vadd.f32 %v643, %v658
      %v683 = vadd.f32 %v644, %v658
      %v684 = vadd.f32 %v645, %v658
      %v685 = vadd.f32 %v646, %v658
      %v686 = vadd.f32 %v647, %v658
      %v687 = vadd.f32 %v648, %v658
      %v688 = vadd.f32 %v649, %v658
      %v689 = vadd.f32 %v650, %v658
      %v690 = vadd.f32 %v651, %v658
      %v691 = vadd.f32 %v652, %v658
      %v692 = vsub.f32 0.0, %v660
      %v693 = vsub.f32 0.0, %v661
      %v694 = vsub.f32 0.0, %v662
      %v695 = vsub.f32 0.0, %v663
      %v696 = vsub.f32 0.0, %v664
      %v697 = vsub.f32 0.0, %v665
      %v698 = vsub.f32 0.0, %v666
      %v699 = vsub.f32 0.0, %v667
      %v700 = vsub.f32 0.0, %v668
      %v701 = vsub.f32 0.0, %v669
      %v702 = vsub.f32 0.0, %v670
      %v703 = vsub.f32 0.0, %v671
      %v704 = vsub.f32 0.0, %v672
      %v705 = vsub.f32 0.0, %v673
      %v706 = vsub.f32 0.0, %v674
      %v707 = vsub.f32 0.0, %v675
      %v708 = vsub.f32 0.0, %v676
      %v709 = vsub.f32 0.0, %v677
      %v710 = vsub.f32 0.0, %v678
      %v711 = vsub.f32 0.0, %v679
      %v712 = vsub.f32 0.0, %v680
      %v713 = vsub.f32 0.0, %v681
      %v714 = vsub.f32 0.0, %v682
      %v715 = vsub.f32 0.0, %v683
      %v716 = vsub.f32 0.0, %v684
      %v717 = vsub.f32 0.0, %v685
      %v718 = vsub.f32 0.0, %v686
      %v719 = vsub.f32 0.0, %v687
      %v720 = vsub.f32 0.0, %v688
      %v721 = vsub.f32 0.0, %v689
      %v722 = vsub.f32 0.0, %v690
      %v723 = vsub.f32 0.0, %v691
      %v724 = vmul.f32 %v692, 1.442695
      %v725 = vpow.pop %v724
      %v726 = vmul.f32 %v693, 1.442695
      %v727 = vpow.pop %v726
      %v728 = vmul.f32 %v694, 1.442695
      %v729 = vpow.pop %v728
      %v730 = vmul.f32 %v695, 1.442695
      %v731 = vpow.pop %v730
      %v732 = vmul.f32 %v696, 1.442695
      %v733 = vpow.pop %v732
      %v734 = vmul.f32 %v697, 1.442695
      %v735 = vpow.pop %v734
      %v736 = vmul.f32 %v698, 1.442695
      %v737 = vpow.pop %v736
      %v738 = vmul.f32 %v699, 1.442695
      %v739 = vpow.pop %v738
      %v740 = vmul.f32 %v700, 1.442695
      %v741 = vpow.pop %v740
      %v742 = vmul.f32 %v701, 1.442695
      %v743 = vpow.pop %v742
      %v744 = vmul.f32 %v702, 1.442695
      %v745 = vpow.pop %v744
      %v746 = vmul.f32 %v703, 1.442695
      %v747 = vpow.pop %v746
      %v748 = vmul.f32 %v704, 1.442695
      %v749 = vpow.pop %v748
      %v750 = vmul.f32 %v705, 1.442695
      %v751 = vpow.pop %v750
      %v752 = vmul.f32 %v706, 1.442695
      %v753 = vpow.pop %v752
      %v754 = vmul.f32 %v707, 1.442695
      %v755 = vpow.pop %v754
      %v756 = vmul.f32 %v708, 1.442695
      %v757 = vpow.pop %v756
      %v758 = vmul.f32 %v709, 1.442695
      %v759 = vpow.pop %v758
      %v760 = vmul.f32 %v710, 1.442695
      %v761 = vpow.pop %v760
      %v762 = vmul.f32 %v711, 1.442695
      %v763 = vpow.pop %v762
      %v764 = vmul.f32 %v712, 1.442695
      %v765 = vpow.pop %v764
      %v766 = vmul.f32 %v713, 1.442695
      %v767 = vpow.pop %v766
      %v768 = vmul.f32 %v714, 1.442695
      %v769 = vpow.pop %v768
      %v770 = vmul.f32 %v715, 1.442695
      %v771 = vpow.pop %v770
      %v772 = vmul.f32 %v716, 1.442695
      %v773 = vpow.pop %v772
      %v774 = vmul.f32 %v717, 1.442695
      %v775 = vpow.pop %v774
      %v776 = vmul.f32 %v718, 1.442695
      %v777 = vpow.pop %v776
      %v778 = vmul.f32 %v719, 1.442695
      %v779 = vpow.pop %v778
      %v780 = vmul.f32 %v720, 1.442695
      %v781 = vpow.pop %v780
      %v782 = vmul.f32 %v721, 1.442695
      %v783 = vpow.pop %v782
      %v784 = vmul.f32 %v722, 1.442695
      %v785 = vpow.pop %v784
      %v786 = vmul.f32 %v723, 1.442695
      %v787 = vpow.pop %v786
      %v788 = vadd.f32 %v725, 1.0
      %v789 = vadd.f32 %v727, 1.0
      %v790 = vadd.f32 %v729, 1.0
      %v791 = vadd.f32 %v731, 1.0
      %v792 = vadd.f32 %v733, 1.0
      %v793 = vadd.f32 %v735, 1.0
      %v794 = vadd.f32 %v737, 1.0
      %v795 = vadd.f32 %v739, 1.0
      %v796 = vadd.f32 %v741, 1.0
      %v797 = vadd.f32 %v743, 1.0
      %v798 = vadd.f32 %v745, 1.0
      %v799 = vadd.f32 %v747, 1.0
      %v800 = vadd.f32 %v749, 1.0
      %v801 = vadd.f32 %v751, 1.0
      %v802 = vadd.f32 %v753, 1.0
      %v803 = vadd.f32 %v755, 1.0
      %v804 = vadd.f32 %v757, 1.0
      %v805 = vadd.f32 %v759, 1.0
      %v806 = vadd.f32 %v761, 1.0
      %v807 = vadd.f32 %v763, 1.0
      %v808 = vadd.f32 %v765, 1.0
      %v809 = vadd.f32 %v767, 1.0
      %v810 = vadd.f32 %v769, 1.0
      %v811 = vadd.f32 %v771, 1.0
      %v812 = vadd.f32 %v773, 1.0
      %v813 = vadd.f32 %v775, 1.0
      %v814 = vadd.f32 %v777, 1.0
      %v815 = vadd.f32 %v779, 1.0
      %v816 = vadd.f32 %v781, 1.0
      %v817 = vadd.f32 %v783, 1.0
      %v818 = vadd.f32 %v785, 1.0
      %v819 = vadd.f32 %v787, 1.0
      %v820 = vrcp.pop %v788
      %v821 = vmul.f32 1.0, %v820
      %v822 = vrcp.pop %v789
      %v823 = vmul.f32 1.0, %v822
      %v824 = vrcp.pop %v790
      %v825 = vmul.f32 1.0, %v824
      %v826 = vrcp.pop %v791
      %v827 = vmul.f32 1.0, %v826
      %v828 = vrcp.pop %v792
      %v829 = vmul.f32 1.0, %v828
      %v830 = vrcp.pop %v793
      %v831 = vmul.f32 1.0, %v830
      %v832 = vrcp.pop %v794
      %v833 = vmul.f32 1.0, %v832
      %v834 = vrcp.pop %v795
      %v835 = vmul.f32 1.0, %v834
      %v836 = vrcp.pop %v796
      %v837 = vmul.f32 1.0, %v836
      %v838 = vrcp.pop %v797
      %v839 = vmul.f32 1.0, %v838
      %v840 = vrcp.pop %v798
      %v841 = vmul.f32 1.0, %v840
      %v842 = vrcp.pop %v799
      %v843 = vmul.f32 1.0, %v842
      %v844 = vrcp.pop %v800
      %v845 = vmul.f32 1.0, %v844
      %v846 = vrcp.pop %v801
      %v847 = vmul.f32 1.0, %v846
      %v848 = vrcp.pop %v802
      %v849 = vmul.f32 1.0, %v848
      %v850 = vrcp.pop %v803
      %v851 = vmul.f32 1.0, %v850
      %v852 = vrcp.pop %v804
      %v853 = vmul.f32 1.0, %v852
      %v854 = vrcp.pop %v805
      %v855 = vmul.f32 1.0, %v854
      %v856 = vrcp.pop %v806
      %v857 = vmul.f32 1.0, %v856
      %v858 = vrcp.pop %v807
      %v859 = vmul.f32 1.0, %v858
      %v860 = vrcp.pop %v808
      %v861 = vmul.f32 1.0, %v860
      %v862 = vrcp.pop %v809
      %v863 = vmul.f32 1.0, %v862
      %v864 = vrcp.pop %v810
      %v865 = vmul.f32 1.0, %v864
      %v866 = vrcp.pop %v811
      %v867 = vmul.f32 1.0, %v866
      %v868 = vrcp.pop %v812
      %v869 = vmul.f32 1.0, %v868
      %v870 = vrcp.pop %v813
      %v871 = vmul.f32 1.0, %v870
      %v872 = vrcp.pop %v814
      %v873 = vmul.f32 1.0, %v872
      %v874 = vrcp.pop %v815
      %v875 = vmul.f32 1.0, %v874
      %v876 = vrcp.pop %v816
      %v877 = vmul.f32 1.0, %v876
      %v878 = vrcp.pop %v817
      %v879 = vmul.f32 1.0, %v878
      %v880 = vrcp.pop %v818
      %v881 = vmul.f32 1.0, %v880
      %v882 = vrcp.pop %v819
      %v883 = vmul.f32 1.0, %v882
      %v884 = vmul.f32 %v660, %v821
      %v885 = vmul.f32 %v661, %v823
      %v886 = vmul.f32 %v662, %v825
      %v887 = vmul.f32 %v663, %v827
      %v888 = vmul.f32 %v664, %v829
      %v889 = vmul.f32 %v665, %v831
      %v890 = vmul.f32 %v666, %v833
      %v891 = vmul.f32 %v667, %v835
      %v892 = vmul.f32 %v668, %v837
      %v893 = vmul.f32 %v669, %v839
      %v894 = vmul.f32 %v670, %v841
      %v895 = vmul.f32 %v671, %v843
      %v896 = vmul.f32 %v672, %v845
      %v897 = vmul.f32 %v673, %v847
      %v898 = vmul.f32 %v674, %v849
      %v899 = vmul.f32 %v675, %v851
      %v900 = vmul.f32 %v676, %v853
      %v901 = vmul.f32 %v677, %v855
      %v902 = vmul.f32 %v678, %v857
      %v903 = vmul.f32 %v679, %v859
      %v904 = vmul.f32 %v680, %v861
      %v905 = vmul.f32 %v681, %v863
      %v906 = vmul.f32 %v682, %v865
      %v907 = vmul.f32 %v683, %v867
      %v908 = vmul.f32 %v684, %v869
      %v909 = vmul.f32 %v685, %v871
      %v910 = vmul.f32 %v686, %v873
      %v911 = vmul.f32 %v687, %v875
      %v912 = vmul.f32 %v688, %v877
      %v913 = vmul.f32 %v689, %v879
      %v914 = vmul.f32 %v690, %v881
      %v915 = vmul.f32 %v691, %v883
      %v916 = vld [vmem:[%s4] sm:$0xff]
      %v917 = vld [vmem:[%s4 + $0x8] sm:$0xff]
      %v918 = vld [vmem:[%s4 + $0x10] sm:$0xff]
      %v919 = vld [vmem:[%s4 + $0x18] sm:$0xff]
      %vm920 = vcmask 261120
      %v922 = vsel %vm920, %v884, 0
      %v925 = vsel %vm920, %v885, 0
      %v928 = vsel %vm920, %v886, 0
      %v931 = vsel %vm920, %v887, 0
      %v934 = vsel %vm920, %v888, 0
      %v937 = vsel %vm920, %v889, 0
      %v940 = vsel %vm920, %v890, 0
      %v943 = vsel %vm920, %v891, 0
      %v946 = vsel %vm920, %v892, 0
      %v949 = vsel %vm920, %v893, 0
      %v952 = vsel %vm920, %v894, 0
      %v955 = vsel %vm920, %v895, 0
      %v958 = vsel %vm920, %v896, 0
      %v961 = vsel %vm920, %v897, 0
      %v964 = vsel %vm920, %v898, 0
      %v967 = vsel %vm920, %v899, 0
      %v970 = vsel %vm920, %v900, 0
      %v973 = vsel %vm920, %v901, 0
      %v976 = vsel %vm920, %v902, 0
      %v979 = vsel %vm920, %v903, 0
      %v982 = vsel %vm920, %v904, 0
      %v985 = vsel %vm920, %v905, 0
      %v988 = vsel %vm920, %v906, 0
      %v991 = vsel %vm920, %v907, 0
      %v994 = vsel %vm920, %v908, 0
      %v997 = vsel %vm920, %v909, 0
      %v1000 = vsel %vm920, %v910, 0
      %v1003 = vsel %vm920, %v911, 0
      %v1006 = vsel %vm920, %v912, 0
      %v1009 = vsel %vm920, %v913, 0
      %v1012 = vsel %vm920, %v914, 0
      %v1015 = vsel %vm920, %v915, 0
      %1017 = vmatprep.subr.mxu0 0.0
      %1018 = vmatpush1.msra.mxu0 %v916
      %1019 = vmatprep.subr.mxu0 0.0
      %1020 = vmatpush1.msra.mxu0 %v917
      %1021 = vmatprep.subr.mxu0 0.0
      %1022 = vmatpush1.msra.mxu0 %v918
      %1023 = vmatprep.subr.mxu0 0.0
      %1024 = vmatpush1.msra.mxu0 %v919
      %1025 = vmatprep.subr.mxu0 0.0
      %1026 = vmatpush1.msra.mxu0 0.0
      %1027 = vmatprep.subr.mxu0 0.0
      %1028 = vmatpush1.msra.mxu0 0.0
      %1029 = vmatprep.subr.mxu0 0.0
      %1030 = vmatpush1.msra.mxu0 0.0
      %1031 = vmatprep.subr.mxu0 0.0
      %1032 = vmatpush1.msra.mxu0 0.0
      %1033 = vmatprep.subr.mxu0 0.0
      %1034 = vmatpush1.msra.mxu0 0.0
      %1035 = vmatprep.subr.mxu0 0.0
      %1036 = vmatpush1.msra.mxu0 0.0
      %1037 = vmatprep.subr.mxu0 0.0
      %1038 = vmatpush1.msra.mxu0 0.0
      %1039 = vmatprep.subr.mxu0 0.0
      %1040 = vmatpush1.msra.mxu0 0.0
      %1041 = vmatprep.subr.mxu0 0.0
      %1042 = vmatpush1.msra.mxu0 0.0
      %1043 = vmatprep.subr.mxu0 0.0
      %1044 = vmatpush1.msra.mxu0 0.0
      %1045 = vmatprep.subr.mxu0 0.0
      %1046 = vmatpush1.msra.mxu0 0.0
      %1047 = vmatprep.subr.mxu0 0.0
      %1048 = vmatpush1.msra.mxu0 0.0
      %1049 = vmatprep.subr.mxu0 0.0
      %1050 = vmatpush1.msra.mxu0 0.0
      %1051 = vmatprep.subr.mxu0 0.0
      %1052 = vmatpush1.msra.mxu0 0.0
      %1053 = vmatprep.subr.mxu0 0.0
      %1054 = vmatpush1.msra.mxu0 0.0
      %1055 = vmatprep.subr.mxu0 0.0
      %1056 = vmatpush1.msra.mxu0 0.0
      %1057 = vmatprep.subr.mxu0 0.0
      %1058 = vmatpush1.msra.mxu0 0.0
      %1059 = vmatprep.subr.mxu0 0.0
      %1060 = vmatpush1.msra.mxu0 0.0
      %1061 = vmatprep.subr.mxu0 0.0
      %1062 = vmatpush1.msra.mxu0 0.0
      %1063 = vmatprep.subr.mxu0 0.0
      %1064 = vmatpush1.msra.mxu0 0.0
      %1065 = vmatprep.subr.mxu0 0.0
      %1066 = vmatpush1.msra.mxu0 0.0
      %1067 = vmatprep.subr.mxu0 0.0
      %1068 = vmatpush1.msra.mxu0 0.0
      %1069 = vmatprep.subr.mxu0 0.0
      %1070 = vmatpush1.msra.mxu0 0.0
      %1071 = vmatprep.subr.mxu0 0.0
      %1072 = vmatpush1.msra.mxu0 0.0
      %1073 = vmatprep.subr.mxu0 0.0
      %1074 = vmatpush1.msra.mxu0 0.0
      %1075 = vmatprep.subr.mxu0 0.0
      %1076 = vmatpush1.msra.mxu0 0.0
      %1077 = vmatprep.subr.mxu0 0.0
      %1078 = vmatpush1.msra.mxu0 0.0
      %1079 = vmatprep.subr.mxu0 0.0
      %1080 = vmatpush1.msra.mxu0 0.0
      %1081 = vmatprep.mubr.f32.mxu0 0.0
      %1082 = vmatmul.mubr.f32.gmra.mrb[0].mxu0 %v922
      %v1083 = vpop.f32.mrb[0].mxu0
      %v1084 = vadd.f32 0.0, %v1083
      %v1085 = vpop.f32.mrb[0].mxu0
      %1086 = vmatprep.mubr.f32.mxu0 0.0
      %1087 = vmatmul.mubr.f32.gmra.mrb[0].mxu0 %v925
      %v1088 = vpop.f32.mrb[0].mxu0
      %v1089 = vadd.f32 0.0, %v1088
      %v1090 = vpop.f32.mrb[0].mxu0
      %1091 = vmatprep.mubr.f32.mxu0 0.0
      %1092 = vmatmul.mubr.f32.gmra.mrb[0].mxu0 %v928
      %v1093 = vpop.f32.mrb[0].mxu0
      %v1094 = vadd.f32 0.0, %v1093
      %v1095 = vpop.f32.mrb[0].mxu0
      %1096 = vmatprep.mubr.f32.mxu0 0.0
      %1097 = vmatmul.mubr.f32.gmra.mrb[0].mxu0 %v931
      %v1098 = vpop.f32.mrb[0].mxu0
      %v1099 = vadd.f32 0.0, %v1098
      %v1100 = vpop.f32.mrb[0].mxu0
      %1101 = vmatprep.mubr.f32.mxu0 0.0
      %1102 = vmatmul.mubr.f32.gmra.mrb[0].mxu0 %v934
      %v1103 = vpop.f32.mrb[0].mxu0
      %v1104 = vadd.f32 0.0, %v1103
      %v1105 = vpop.f32.mrb[0].mxu0
      %1106 = vmatprep.mubr.f32.mxu0 0.0
      %1107 = vmatmul.mubr.f32.gmra.mrb[0].mxu0 %v937
      %v1108 = vpop.f32.mrb[0].mxu0
      %v1109 = vadd.f32 0.0, %v1108
      %v1110 = vpop.f32.mrb[0].mxu0
      %1111 = vmatprep.mubr.f32.mxu0 0.0
      %1112 = vmatmul.mubr.f32.gmra.mrb[0].mxu0 %v940
      %v1113 = vpop.f32.mrb[0].mxu0
      %v1114 = vadd.f32 0.0, %v1113
      %v1115 = vpop.f32.mrb[0].mxu0
      %1116 = vmatprep.mubr.f32.mxu0 0.0
      %1117 = vmatmul.mubr.f32.gmra.mrb[0].mxu0 %v943
      %v1118 = vpop.f32.mrb[0].mxu0
      %v1119 = vadd.f32 0.0, %v1118
      %v1120 = vpop.f32.mrb[0].mxu0
      %1121 = vmatprep.mubr.f32.mxu0 0.0
      %1122 = vmatmul.mubr.f32.gmra.mrb[0].mxu0 %v946
      %v1123 = vpop.f32.mrb[0].mxu0
      %v1124 = vadd.f32 0.0, %v1123
      %v1125 = vpop.f32.mrb[0].mxu0
      %1126 = vmatprep.mubr.f32.mxu0 0.0
      %1127 = vmatmul.mubr.f32.gmra.mrb[0].mxu0 %v949
      %v1128 = vpop.f32.mrb[0].mxu0
      %v1129 = vadd.f32 0.0, %v1128
      %v1130 = vpop.f32.mrb[0].mxu0
      %1131 = vmatprep.mubr.f32.mxu0 0.0
      %1132 = vmatmul.mubr.f32.gmra.mrb[0].mxu0 %v952
      %v1133 = vpop.f32.mrb[0].mxu0
      %v1134 = vadd.f32 0.0, %v1133
      %v1135 = vpop.f32.mrb[0].mxu0
      %1136 = vmatprep.mubr.f32.mxu0 0.0
      %1137 = vmatmul.mubr.f32.gmra.mrb[0].mxu0 %v955
      %v1138 = vpop.f32.mrb[0].mxu0
      %v1139 = vadd.f32 0.0, %v1138
      %v1140 = vpop.f32.mrb[0].mxu0
      %1141 = vmatprep.mubr.f32.mxu0 0.0
      %1142 = vmatmul.mubr.f32.gmra.mrb[0].mxu0 %v958
      %v1143 = vpop.f32.mrb[0].mxu0
      %v1144 = vadd.f32 0.0, %v1143
      %v1145 = vpop.f32.mrb[0].mxu0
      %1146 = vmatprep.mubr.f32.mxu0 0.0
      %1147 = vmatmul.mubr.f32.gmra.mrb[0].mxu0 %v961
      %v1148 = vpop.f32.mrb[0].mxu0
      %v1149 = vadd.f32 0.0, %v1148
      %v1150 = vpop.f32.mrb[0].mxu0
      %1151 = vmatprep.mubr.f32.mxu0 0.0
      %1152 = vmatmul.mubr.f32.gmra.mrb[0].mxu0 %v964
      %v1153 = vpop.f32.mrb[0].mxu0
      %v1154 = vadd.f32 0.0, %v1153
      %v1155 = vpop.f32.mrb[0].mxu0
      %1156 = vmatprep.mubr.f32.mxu0 0.0
      %1157 = vmatmul.mubr.f32.gmra.mrb[0].mxu0 %v967
      %v1158 = vpop.f32.mrb[0].mxu0
      %v1159 = vadd.f32 0.0, %v1158
      %v1160 = vpop.f32.mrb[0].mxu0
      %1161 = vmatprep.mubr.f32.mxu0 0.0
      %1162 = vmatmul.mubr.f32.gmra.mrb[0].mxu0 %v970
      %v1163 = vpop.f32.mrb[0].mxu0
      %v1164 = vadd.f32 0.0, %v1163
      %v1165 = vpop.f32.mrb[0].mxu0
      %1166 = vmatprep.mubr.f32.mxu0 0.0
      %1167 = vmatmul.mubr.f32.gmra.mrb[0].mxu0 %v973
      %v1168 = vpop.f32.mrb[0].mxu0
      %v1169 = vadd.f32 0.0, %v1168
      %v1170 = vpop.f32.mrb[0].mxu0
      %1171 = vmatprep.mubr.f32.mxu0 0.0
      %1172 = vmatmul.mubr.f32.gmra.mrb[0].mxu0 %v976
      %v1173 = vpop.f32.mrb[0].mxu0
      %v1174 = vadd.f32 0.0, %v1173
      %v1175 = vpop.f32.mrb[0].mxu0
      %1176 = vmatprep.mubr.f32.mxu0 0.0
      %1177 = vmatmul.mubr.f32.gmra.mrb[0].mxu0 %v979
      %v1178 = vpop.f32.mrb[0].mxu0
      %v1179 = vadd.f32 0.0, %v1178
      %v1180 = vpop.f32.mrb[0].mxu0
      %1181 = vmatprep.mubr.f32.mxu0 0.0
      %1182 = vmatmul.mubr.f32.gmra.mrb[0].mxu0 %v982
      %v1183 = vpop.f32.mrb[0].mxu0
      %v1184 = vadd.f32 0.0, %v1183
      %v1185 = vpop.f32.mrb[0].mxu0
      %1186 = vmatprep.mubr.f32.mxu0 0.0
      %1187 = vmatmul.mubr.f32.gmra.mrb[0].mxu0 %v985
      %v1188 = vpop.f32.mrb[0].mxu0
      %v1189 = vadd.f32 0.0, %v1188
      %v1190 = vpop.f32.mrb[0].mxu0
      %1191 = vmatprep.mubr.f32.mxu0 0.0
      %1192 = vmatmul.mubr.f32.gmra.mrb[0].mxu0 %v988
      %v1193 = vpop.f32.mrb[0].mxu0
      %v1194 = vadd.f32 0.0, %v1193
      %v1195 = vpop.f32.mrb[0].mxu0
      %1196 = vmatprep.mubr.f32.mxu0 0.0
      %1197 = vmatmul.mubr.f32.gmra.mrb[0].mxu0 %v991
      %v1198 = vpop.f32.mrb[0].mxu0
      %v1199 = vadd.f32 0.0, %v1198
      %v1200 = vpop.f32.mrb[0].mxu0
      %1201 = vmatprep.mubr.f32.mxu0 0.0
      %1202 = vmatmul.mubr.f32.gmra.mrb[0].mxu0 %v994
      %v1203 = vpop.f32.mrb[0].mxu0
      %v1204 = vadd.f32 0.0, %v1203
      %v1205 = vpop.f32.mrb[0].mxu0
      %1206 = vmatprep.mubr.f32.mxu0 0.0
      %1207 = vmatmul.mubr.f32.gmra.mrb[0].mxu0 %v997
      %v1208 = vpop.f32.mrb[0].mxu0
      %v1209 = vadd.f32 0.0, %v1208
      %v1210 = vpop.f32.mrb[0].mxu0
      %1211 = vmatprep.mubr.f32.mxu0 0.0
      %1212 = vmatmul.mubr.f32.gmra.mrb[0].mxu0 %v1000
      %v1213 = vpop.f32.mrb[0].mxu0
      %v1214 = vadd.f32 0.0, %v1213
      %v1215 = vpop.f32.mrb[0].mxu0
      %1216 = vmatprep.mubr.f32.mxu0 0.0
      %1217 = vmatmul.mubr.f32.gmra.mrb[0].mxu0 %v1003
      %v1218 = vpop.f32.mrb[0].mxu0
      %v1219 = vadd.f32 0.0, %v1218
      %v1220 = vpop.f32.mrb[0].mxu0
      %1221 = vmatprep.mubr.f32.mxu0 0.0
      %1222 = vmatmul.mubr.f32.gmra.mrb[0].mxu0 %v1006
      %v1223 = vpop.f32.mrb[0].mxu0
      %v1224 = vadd.f32 0.0, %v1223
      %v1225 = vpop.f32.mrb[0].mxu0
      %1226 = vmatprep.mubr.f32.mxu0 0.0
      %1227 = vmatmul.mubr.f32.gmra.mrb[0].mxu0 %v1009
      %v1228 = vpop.f32.mrb[0].mxu0
      %v1229 = vadd.f32 0.0, %v1228
      %v1230 = vpop.f32.mrb[0].mxu0
      %1231 = vmatprep.mubr.f32.mxu0 0.0
      %1232 = vmatmul.mubr.f32.gmra.mrb[0].mxu0 %v1012
      %v1233 = vpop.f32.mrb[0].mxu0
      %v1234 = vadd.f32 0.0, %v1233
      %v1235 = vpop.f32.mrb[0].mxu0
      %1236 = vmatprep.mubr.f32.mxu0 0.0
      %1237 = vmatmul.mubr.f32.gmra.mrb[0].mxu0 %v1015
      %v1238 = vpop.f32.mrb[0].mxu0
      %v1239 = vadd.f32 0.0, %v1238
      %v1240 = vpop.f32.mrb[0].mxu0
      %1241 = vdwg.mxu0
      %v1242 = vadd.f32 %v884, %v1084
      %v1243 = vadd.f32 %v885, %v1089
      %v1244 = vadd.f32 %v886, %v1094
      %v1245 = vadd.f32 %v887, %v1099
      %v1246 = vadd.f32 %v888, %v1104
      %v1247 = vadd.f32 %v889, %v1109
      %v1248 = vadd.f32 %v890, %v1114
      %v1249 = vadd.f32 %v891, %v1119
      %v1250 = vadd.f32 %v892, %v1124
      %v1251 = vadd.f32 %v893, %v1129
      %v1252 = vadd.f32 %v894, %v1134
      %v1253 = vadd.f32 %v895, %v1139
      %v1254 = vadd.f32 %v896, %v1144
      %v1255 = vadd.f32 %v897, %v1149
      %v1256 = vadd.f32 %v898, %v1154
      %v1257 = vadd.f32 %v899, %v1159
      %v1258 = vadd.f32 %v900, %v1164
      %v1259 = vadd.f32 %v901, %v1169
      %v1260 = vadd.f32 %v902, %v1174
      %v1261 = vadd.f32 %v903, %v1179
      %v1262 = vadd.f32 %v904, %v1184
      %v1263 = vadd.f32 %v905, %v1189
      %v1264 = vadd.f32 %v906, %v1194
      %v1265 = vadd.f32 %v907, %v1199
      %v1266 = vadd.f32 %v908, %v1204
      %v1267 = vadd.f32 %v909, %v1209
      %v1268 = vadd.f32 %v910, %v1214
      %v1269 = vadd.f32 %v911, %v1219
      %v1270 = vadd.f32 %v912, %v1224
      %v1271 = vadd.f32 %v913, %v1229
      %v1272 = vadd.f32 %v914, %v1234
      %v1273 = vadd.f32 %v915, %v1239
      %v1274 = vld [vmem:[%s5] sm:$0x1]
      %v1276 = vlaneseq
      %v1277 = vshrl.u32 %v1276, 7
      %v1278 = vsub.s32 0, %v1277
      %v1279 = vrot.slane %v1274, %v1278
      %v1281 = vadd.f32 %v1242, %v1279
      %v1282 = vadd.f32 %v1243, %v1279
      %v1283 = vadd.f32 %v1244, %v1279
      %v1284 = vadd.f32 %v1245, %v1279
      %v1285 = vadd.f32 %v1246, %v1279
      %v1286 = vadd.f32 %v1247, %v1279
      %v1287 = vadd.f32 %v1248, %v1279
      %v1288 = vadd.f32 %v1249, %v1279
      %v1289 = vadd.f32 %v1250, %v1279
      %v1290 = vadd.f32 %v1251, %v1279
      %v1291 = vadd.f32 %v1252, %v1279
      %v1292 = vadd.f32 %v1253, %v1279
      %v1293 = vadd.f32 %v1254, %v1279
      %v1294 = vadd.f32 %v1255, %v1279
      %v1295 = vadd.f32 %v1256, %v1279
      %v1296 = vadd.f32 %v1257, %v1279
      %v1297 = vadd.f32 %v1258, %v1279
      %v1298 = vadd.f32 %v1259, %v1279
      %v1299 = vadd.f32 %v1260, %v1279
      %v1300 = vadd.f32 %v1261, %v1279
      %v1301 = vadd.f32 %v1262, %v1279
      %v1302 = vadd.f32 %v1263, %v1279
      %v1303 = vadd.f32 %v1264, %v1279
      %v1304 = vadd.f32 %v1265, %v1279
      %v1305 = vadd.f32 %v1266, %v1279
      %v1306 = vadd.f32 %v1267, %v1279
      %v1307 = vadd.f32 %v1268, %v1279
      %v1308 = vadd.f32 %v1269, %v1279
      %v1309 = vadd.f32 %v1270, %v1279
      %v1310 = vadd.f32 %v1271, %v1279
      %v1311 = vadd.f32 %v1272, %v1279
      %v1312 = vadd.f32 %v1273, %v1279
      %1313 = vst.msk [vmem:[%s253] sm:$0xff] %vm920, %v1281
      %1314 = vst.msk [vmem:[%s253 + $0x8] sm:$0xff] %vm920, %v1282
      %1315 = vst.msk [vmem:[%s253 + $0x10] sm:$0xff] %vm920, %v1283
      %1316 = vst.msk [vmem:[%s253 + $0x18] sm:$0xff] %vm920, %v1284
      %1317 = vst.msk [vmem:[%s253 + $0x20] sm:$0xff] %vm920, %v1285
      %1318 = vst.msk [vmem:[%s253 + $0x28] sm:$0xff] %vm920, %v1286
      %1319 = vst.msk [vmem:[%s253 + $0x30] sm:$0xff] %vm920, %v1287
      %1320 = vst.msk [vmem:[%s253 + $0x38] sm:$0xff] %vm920, %v1288
      %1321 = vst.msk [vmem:[%s253 + $0x40] sm:$0xff] %vm920, %v1289
      %1322 = vst.msk [vmem:[%s253 + $0x48] sm:$0xff] %vm920, %v1290
      %1323 = vst.msk [vmem:[%s253 + $0x50] sm:$0xff] %vm920, %v1291
      %1324 = vst.msk [vmem:[%s253 + $0x58] sm:$0xff] %vm920, %v1292
      %1325 = vst.msk [vmem:[%s253 + $0x60] sm:$0xff] %vm920, %v1293
      %1326 = vst.msk [vmem:[%s253 + $0x68] sm:$0xff] %vm920, %v1294
      %1327 = vst.msk [vmem:[%s253 + $0x70] sm:$0xff] %vm920, %v1295
      %1328 = vst.msk [vmem:[%s253 + $0x78] sm:$0xff] %vm920, %v1296
      %1329 = vst.msk [vmem:[%s253 + $0x80] sm:$0xff] %vm920, %v1297
      %1330 = vst.msk [vmem:[%s253 + $0x88] sm:$0xff] %vm920, %v1298
      %1331 = vst.msk [vmem:[%s253 + $0x90] sm:$0xff] %vm920, %v1299
      %1332 = vst.msk [vmem:[%s253 + $0x98] sm:$0xff] %vm920, %v1300
      %1333 = vst.msk [vmem:[%s253 + $0xa0] sm:$0xff] %vm920, %v1301
      %1334 = vst.msk [vmem:[%s253 + $0xa8] sm:$0xff] %vm920, %v1302
      %1335 = vst.msk [vmem:[%s253 + $0xb0] sm:$0xff] %vm920, %v1303
      %1336 = vst.msk [vmem:[%s253 + $0xb8] sm:$0xff] %vm920, %v1304
      %1337 = vst.msk [vmem:[%s253 + $0xc0] sm:$0xff] %vm920, %v1305
      %1338 = vst.msk [vmem:[%s253 + $0xc8] sm:$0xff] %vm920, %v1306
      %1339 = vst.msk [vmem:[%s253 + $0xd0] sm:$0xff] %vm920, %v1307
      %1340 = vst.msk [vmem:[%s253 + $0xd8] sm:$0xff] %vm920, %v1308
      %1341 = vst.msk [vmem:[%s253 + $0xe0] sm:$0xff] %vm920, %v1309
      %1342 = vst.msk [vmem:[%s253 + $0xe8] sm:$0xff] %vm920, %v1310
      %1343 = vst.msk [vmem:[%s253 + $0xf0] sm:$0xff] %vm920, %v1311
      %1344 = vst.msk [vmem:[%s253 + $0xf8] sm:$0xff] %vm920, %v1312
      %s1345 = smul.u32 32, %s17
      %p1346 = scmp.lt.s32.totalorder %s1345, 63
      %s1347 = scalar_select %p1346, %s1345, 63
      %s1348 = smul.addr %s1347, 8
      %s1349 = scalar_lea.vmem %s6, %s1348
      // Predicated region
      $region45: #{tpu_custom_call.1} parent=43 // pred_check
        %p1350 = pneg %p166
      $region46: #{tpu_custom_call.1} parent=43 // pred_check_branch
        %1352 = sbr.rel (%p1350) target = $region48
      $region47: #{tpu_custom_call.1} parent=43 // pred_region
        %s1353 = smul.u32 32, %s17
      $region48: #{tpu_custom_call.1} parent=43 // pred_fallthru
        _
    $region44: #{tpu_custom_call.1} parent=5 // pred_fallthru
      _
    %p1354 = scmp.le.s32.totalorder 2, %s12
    // Predicated region
    $region49: #{tpu_custom_call.1} parent=5 // pred_check
      %p1355 = pneg %p1354
    $region50: #{tpu_custom_call.1} parent=5 // pred_check_branch
      %1357 = sbr.rel (%p1355) target = $region52
    $region51: #{tpu_custom_call.1} parent=5 // pred_region
      %s1358 = ssub.s32 %s12, 2
      // Predicated region
      $region53: #{tpu_custom_call.1} parent=51 // pred_check
        %p1359 = pneg %p172
      $region54: #{tpu_custom_call.1} parent=51 // pred_check_branch
        %1361 = sbr.rel (%p1359) target = $region56
      $region55: #{tpu_custom_call.1} parent=51 // pred_region
        %s1362 = smul.u32 32, %s18
        %p1363 = scmp.lt.s32.totalorder %s1362, 63
        %s1364 = scalar_select %p1363, %s1362, 63
        %s1365 = smul.addr %s1364, 8
        %s1366 = scalar_lea.vmem %s6, %s1365
      $region56: #{tpu_custom_call.1} parent=51 // pred_fallthru
        _
    $region52: #{tpu_custom_call.1} parent=5 // pred_fallthru
      _
  $region6: #{tpu_custom_call.1} parent=0 // loop_footer
    %s16 = sadd.s32 1, %s12
  $region7: #{tpu_custom_call.1} parent=0 // loop_footer_branch
    %11 = sbr.rel target = $region3
  $region8: #{tpu_custom_call.1} parent=0 // loop_exit
    _

</llo_original>
